<compile_context>
chip_gen: v5e
topology: v5e:2x2
jax: 0.10.0
libtpu: 0.0.40
codegen_flags: <defaults>
</compile_context>

<pallas_src>
import functools

import jax
import jax.numpy as jnp
from jax.experimental import pallas as pl
from jax.experimental.pallas import tpu as pltpu

LANE = 128
NEG_INF = -1e30


def _round_up(n, m):
    return ((n + m - 1) // m) * m


def _cdiv(a, b):
    return (a + b - 1) // b


def _pad_axis(x, axis, size, value=0):
    pad = size - x.shape[axis]
    if pad == 0:
        return x
    widths = [(0, 0)] * x.ndim
    widths[axis] = (0, pad)
    return jnp.pad(x, widths, constant_values=value)


def _vmem_limit_bytes():
    # Generation-aware budget: ~3/4 of physical VMEM (v7x 64 MiB -> 48 MiB,
    # v5e/v6e 128 MiB -> 96 MiB); conservative fallback if the query fails.
    try:
        cap = int(pltpu.get_tpu_info().vmem_capacity_bytes)
    except Exception:
        cap = 64 * 1024 * 1024
    return int(min(cap * 3 // 4, 100 * 1024 * 1024))


def _resident_spec(block_shape):
    # Constant-index (parameter) blocks: single-buffer them -- their index_map
    # is all-zeros every grid step, so double-buffering only burns VMEM.
    index_map = lambda i: (0,) * len(block_shape)
    try:
        return pl.BlockSpec(block_shape, index_map,
                            pipeline_mode=pl.Buffered(1))
    except (TypeError, AttributeError):
        return pl.BlockSpec(block_shape, index_map)


# -----------------------------------------------------------------------------
# Fused embedder + encoder + decoder + cross-entropy kernel.
# The token axis lives on lanes throughout ("transposed" layout), so ids /
# labels / losses stay lane-dense and no in-kernel transposes are needed.
# -----------------------------------------------------------------------------
def model_forward_kernel(ids_ref, lab_ref, tab_t_ref, w_enc_t_ref, b_enc_ref,
                         w_dec_t_ref, b_dec_ref, loss_ref):
    # ids_ref    : [1, 1, R] int32     token ids for this row tile
    # lab_ref    : [1, 1, R] int32     gold label ids
    # tab_t_ref  : [E_pad, V_pad] bf16 embedding table (transposed, resident)
    # w_enc_t_ref: [H_pad, E_pad] bf16, b_enc_ref: [H_pad, 1] f32
    # w_dec_t_ref: [C_pad, H_pad] bf16, b_dec_ref: [C_pad, 1] f32 (pad = -1e30)
    # loss_ref   : [1, 1, R] f32       per-token loss
    r = ids_ref.shape[-1]
    v_pad = tab_t_ref.shape[-1]

    ids = ids_ref[0]                                          # [1, R] int32
    lab = lab_ref[0]                                          # [1, R] int32

    # embedder: gather table rows via a one-hot MXU matmul (exact for one-hot)
    vocab_iota = jax.lax.broadcasted_iota(jnp.int32, (v_pad, r), 0)
    onehot_t = (vocab_iota == ids).astype(tab_t_ref.dtype)    # [V_pad, R]
    x_t = jnp.dot(tab_t_ref[...], onehot_t,
                  preferred_element_type=jnp.float32)         # [E_pad, R]
    x_t = x_t.astype(w_enc_t_ref.dtype)

    # encoder: h = tanh(W_enc x + b)   (f32 accumulation / activation)
    # TODO(synk): on v6e/v7x the tanh could run in bf16 (2x EUP throughput);
    # kept in f32 to match the reference numerics and v5e (no bf16 EUP).
    h_t = jnp.dot(w_enc_t_ref[...], x_t,
                  preferred_element_type=jnp.float32)         # [H_pad, R]
    h_t = jnp.tanh(h_t + b_enc_ref[...])

    # decoder: logits = W_dec h + b   (padded classes carry a -1e30 bias)
    logits_t = jnp.dot(w_dec_t_ref[...], h_t.astype(w_dec_t_ref.dtype),
                       preferred_element_type=jnp.float32)    # [C_pad, R]
    logits_t = logits_t + b_dec_ref[...]

    # per-token softmax cross-entropy over the class (sublane) axis
    # NOTE: labels are assumed to lie in [0, C); out-of-range labels would
    # silently yield gold = 0 (loss = lse).
    m = jnp.max(logits_t, axis=0, keepdims=True)              # [1, R]
    lse = m + jnp.log(jnp.sum(jnp.exp(logits_t - m), axis=0, keepdims=True))
    cls = jax.lax.broadcasted_iota(jnp.int32, logits_t.shape, 0)
    gold = jnp.sum(jnp.where(cls == lab, logits_t, 0.0),
                   axis=0, keepdims=True)                     # [1, R]
    loss_ref[0] = lse - gold


# -----------------------------------------------------------------------------
# Wrapper: lane padding, generation-aware tiling, per-example mean
# -----------------------------------------------------------------------------
@functools.partial(jax.jit, static_argnames=("tile_rows",))
def model_forward(token_ids, labels, emb_table, w_enc, b_enc, w_dec, b_dec,
                  *, tile_rows=1024):
    B, L = token_ids.shape
    V, E = emb_table.shape
    H = w_enc.shape[1]
    C = w_dec.shape[1]

    V_pad = _round_up(V, LANE)
    E_pad = _round_up(E, LANE)
    H_pad = _round_up(H, LANE)
    C_pad = _round_up(C, LANE)
    BL = B * L

    vmem_limit = _vmem_limit_bytes()

    # VMEM bookkeeping: resident (single-buffered) params + per-row stream cost
    resident = (2 * (E_pad * V_pad + H_pad * E_pad + C_pad * H_pad)
                + 4 * LANE * (H_pad + C_pad))     # bf16 weights + f32 bias bufs
    per_row = 3 * 2 * 4 + 2 * (V_pad + E_pad) + 4 * (H_pad + C_pad)
    r_cap = max(LANE,
                ((vmem_limit - resident - (8 << 20)) // per_row)
                // LANE * LANE)

    # row tile: multiple of 128 (lane-dense ids/labels/losses), capped by VMEM
    R = _round_up(min(tile_rows, max(BL, 1)), LANE)
    R = min(R, r_cap)
    n_tiles = _cdiv(BL, R)
    if n_tiles < 2 and R > LANE:
        # keep >= 2 "parallel" grid steps so both v7x TensorCores get work
        # (no-op cost on single-TC v5e/v6e)
        R = _round_up(_cdiv(BL, 2), LANE)
        n_tiles = _cdiv(BL, R)
    BL_pad = n_tiles * R

    # ids / labels: lane-dense (n_tiles, 1, R) int32 (no [R,1] lane padding)
    ids_flat = _pad_axis(token_ids.reshape(BL).astype(jnp.int32), 0, BL_pad)
    lab_flat = _pad_axis(labels.reshape(BL).astype(jnp.int32), 0, BL_pad)
    ids_3d = ids_flat.reshape(n_tiles, 1, R)
    lab_3d = lab_flat.reshape(n_tiles, 1, R)

    # parameters: pad to lane multiples, cast to bf16, pre-transpose so every
    # in-kernel matmul is a standard [out, in] @ [in, R] contraction.
    # TODO(synk): the fused gather assumes the bf16 table fits in VMEM
    # (V_pad*E_pad*2B); large-vocab embedders need a streamed / DMA gather.
    tab_t = _pad_axis(_pad_axis(emb_table, 0, V_pad), 1, E_pad) \
        .astype(jnp.bfloat16).T                               # [E_pad, V_pad]
    w_enc_t = _pad_axis(_pad_axis(w_enc, 0, E_pad), 1, H_pad) \
        .astype(jnp.bfloat16).T                               # [H_pad, E_pad]
    w_dec_t = _pad_axis(_pad_axis(w_dec, 0, H_pad), 1, C_pad) \
        .astype(jnp.bfloat16).T                               # [C_pad, H_pad]
    b_enc_c = _pad_axis(b_enc.astype(jnp.float32), 0, H_pad).reshape(H_pad, 1)
    b_dec_c = _pad_axis(b_dec.astype(jnp.float32), 0, C_pad,
                        value=NEG_INF).reshape(C_pad, 1)

    flops = 2 * BL_pad * (V_pad * E_pad + E_pad * H_pad + H_pad * C_pad)
    transcendentals = BL_pad * (H_pad + C_pad + 1)
    bytes_accessed = (ids_3d.size * 4 + lab_3d.size * 4 + BL_pad * 4
                      + 2 * (tab_t.size + w_enc_t.size + w_dec_t.size)
                      + 4 * (b_enc_c.size + b_dec_c.size))

    tok_losses = pl.pallas_call(
        model_forward_kernel,
        out_shape=jax.ShapeDtypeStruct((n_tiles, 1, R), jnp.float32),
        grid=(n_tiles,),
        in_specs=[
            pl.BlockSpec((1, 1, R), lambda i: (i, 0, 0)),   # token ids: tiled
            pl.BlockSpec((1, 1, R), lambda i: (i, 0, 0)),   # labels: tiled
            _resident_spec((E_pad, V_pad)),                 # emb table^T
            _resident_spec((H_pad, E_pad)),                 # W_enc^T
            _resident_spec((H_pad, 1)),                     # b_enc
            _resident_spec((C_pad, H_pad)),                 # W_dec^T
            _resident_spec((C_pad, 1)),                     # b_dec
        ],
        out_specs=pl.BlockSpec((1, 1, R), lambda i: (i, 0, 0)),
        compiler_params=pltpu.CompilerParams(
            dimension_semantics=("parallel",),
            vmem_limit_bytes=vmem_limit),
        cost_estimate=pl.CostEstimate(flops=flops,
                                      transcendentals=transcendentals,
                                      bytes_accessed=bytes_accessed),
    )(ids_3d, lab_3d, tab_t, w_enc_t, b_enc_c, w_dec_t, b_dec_c)

    tok_losses = tok_losses.reshape(BL_pad)[:BL].reshape(B, L)
    # TODO(synk): real eznlp batches carry sequence lengths; padded positions
    # should be masked out of this mean (gate tok_losses and the divisor).
    return jnp.mean(tok_losses, axis=-1)                     # [B]


# -----------------------------------------------------------------------------
# Pure-JAX reference (same bf16 casts / f32 accumulation as the kernel)
# -----------------------------------------------------------------------------
def model_forward_ref(token_ids, labels, emb_table, w_enc, b_enc, w_dec, b_dec):
    x = emb_table.astype(jnp.bfloat16)[token_ids]                    # [B,L,E]
    h = jnp.einsum('ble,eh->blh', x, w_enc.astype(jnp.bfloat16),
                   preferred_element_type=jnp.float32)
    h = jnp.tanh(h + b_enc.astype(jnp.float32))
    logits = jnp.einsum('blh,hc->blc', h.astype(jnp.bfloat16),
                        w_dec.astype(jnp.bfloat16),
                        preferred_element_type=jnp.float32)
    logits = logits + b_dec.astype(jnp.float32)
    logp = jax.nn.log_softmax(logits, axis=-1)
    tok_loss = -jnp.take_along_axis(logp, labels[..., None], axis=-1)[..., 0]
    return jnp.mean(tok_loss, axis=-1)


if __name__ == "__main__":
    # small, deterministic config (lane-friendly feature dims)
    B, L, V, E, H, C = 4, 64, 64, 128, 128, 16

    key = jax.random.PRNGKey(0)
    k_emb, k_we, k_be, k_wd, k_bd, k_tok, k_lab = jax.random.split(key, 7)

    # deterministic synthetic parameters (no checkpoint loading)
    emb_table = jax.random.normal(k_emb, (V, E), jnp.float32) * 0.1
    w_enc = jax.random.normal(k_we, (E, H), jnp.float32) * 0.1
    b_enc = jax.random.normal(k_be, (H,), jnp.float32) * 0.01
    w_dec = jax.random.normal(k_wd, (H, C), jnp.float32) * 0.1
    b_dec = jax.random.normal(k_bd, (C,), jnp.float32) * 0.01

    # synthetic batch: token ids + gold labels
    token_ids = jax.random.randint(k_tok, (B, L), 0, V)
    labels = jax.random.randint(k_lab, (B, L), 0, C)

    losses = model_forward(token_ids, labels, emb_table, w_enc, b_enc,
                           w_dec, b_dec)
    jax.block_until_ready(losses)

    ref = model_forward_ref(token_ids, labels, emb_table, w_enc, b_enc,
                            w_dec, b_dec)
    assert losses.shape == (B,)
    assert jnp.allclose(losses, ref, atol=2e-3, rtol=2e-3), (losses, ref)

    print("KERNEL_OK")
</pallas_src>

<mosaic_0001>
module attributes {stable_mosaic.version = 11 : i64} {
  func.func @model_forward_kernel(%arg0: i32, %arg1: memref<1x1x128xi32, #tpu.memory_space<vmem>>, %arg2: memref<1x1x128xi32, #tpu.memory_space<vmem>>, %arg3: memref<128x128xbf16, #tpu.memory_space<vmem>>, %arg4: memref<128x128xbf16, #tpu.memory_space<vmem>>, %arg5: memref<128x1xf32, #tpu.memory_space<vmem>>, %arg6: memref<128x128xbf16, #tpu.memory_space<vmem>>, %arg7: memref<128x1xf32, #tpu.memory_space<vmem>>, %arg8: memref<1x1x128xf32, #tpu.memory_space<vmem>>) attributes {dimension_semantics = [#tpu.dimension_semantics<parallel>], iteration_bounds = array<i64: 2>, scalar_prefetch = 0 : i64, scratch_operands = 0 : i64, tpu.core_type = #tpu.core_type<tc>, window_params = [{transform_indices = @transform_0, window_bounds = array<i64: 1, 1, 128>}, {transform_indices = @transform_1, window_bounds = array<i64: 1, 1, 128>}, {pipeline_mode = #tpu.pipeline_mode<synchronous>, transform_indices = @transform_2, window_bounds = array<i64: 128, 128>}, {pipeline_mode = #tpu.pipeline_mode<synchronous>, transform_indices = @transform_3, window_bounds = array<i64: 128, 128>}, {pipeline_mode = #tpu.pipeline_mode<synchronous>, transform_indices = @transform_4, window_bounds = array<i64: 128, 1>}, {pipeline_mode = #tpu.pipeline_mode<synchronous>, transform_indices = @transform_5, window_bounds = array<i64: 128, 128>}, {pipeline_mode = #tpu.pipeline_mode<synchronous>, transform_indices = @transform_6, window_bounds = array<i64: 128, 1>}, {transform_indices = @transform_7, window_bounds = array<i64: 1, 1, 128>}]} {
    %c0 = arith.constant 0 : index
    %c0_0 = arith.constant 0 : index
    %c0_1 = arith.constant 0 : index
    %0 = vector.load %arg1[%c0, %c0_0, %c0_1] : memref<1x1x128xi32, #tpu.memory_space<vmem>>, vector<1x1x128xi32>
    %1 = vector.shape_cast %0 : vector<1x1x128xi32> to vector<1x128xi32>
    %c0_2 = arith.constant 0 : index
    %c0_3 = arith.constant 0 : index
    %c0_4 = arith.constant 0 : index
    %2 = vector.load %arg2[%c0_2, %c0_3, %c0_4] : memref<1x1x128xi32, #tpu.memory_space<vmem>>, vector<1x1x128xi32>
    %3 = vector.shape_cast %2 : vector<1x1x128xi32> to vector<1x128xi32>
    %4 = tpu.iota {dimensions = array<i32: 0>} : vector<128x128xi32>
    %5 = vector.broadcast %1 : vector<1x128xi32> to vector<128x128xi32>
    %6 = arith.cmpi eq, %4, %5 : vector<128x128xi32>
    %7 = arith.extui %6 : vector<128x128xi1> to vector<128x128xi32>
    %8 = arith.sitofp %7 : vector<128x128xi32> to vector<128x128xf32>
    %9 = arith.truncf %8 : vector<128x128xf32> to vector<128x128xbf16>
    %c0_5 = arith.constant 0 : index
    %c0_6 = arith.constant 0 : index
    %10 = vector.load %arg3[%c0_5, %c0_6] : memref<128x128xbf16, #tpu.memory_space<vmem>>, vector<128x128xbf16>
    %cst = arith.constant dense<0.000000e+00> : vector<128x128xf32>
    %11 = tpu.matmul %10, %9, %cst {dimension_numbers = #tpu.dot_dimension_numbers<[1], [0], [0], [1], [0, 0, 1, 1], [], []>} : vector<128x128xbf16>, vector<128x128xbf16>, vector<128x128xf32> -> vector<128x128xf32>
    %12 = arith.truncf %11 : vector<128x128xf32> to vector<128x128xbf16>
    %c0_7 = arith.constant 0 : index
    %c0_8 = arith.constant 0 : index
    %13 = vector.load %arg4[%c0_7, %c0_8] : memref<128x128xbf16, #tpu.memory_space<vmem>>, vector<128x128xbf16>
    %cst_9 = arith.constant dense<0.000000e+00> : vector<128x128xf32>
    %14 = tpu.matmul %13, %12, %cst_9 {dimension_numbers = #tpu.dot_dimension_numbers<[1], [0], [0], [1], [0, 0, 1, 1], [], []>} : vector<128x128xbf16>, vector<128x128xbf16>, vector<128x128xf32> -> vector<128x128xf32>
    %c0_10 = arith.constant 0 : index
    %c0_11 = arith.constant 0 : index
    %15 = vector.load %arg5[%c0_10, %c0_11] : memref<128x1xf32, #tpu.memory_space<vmem>>, vector<128x1xf32>
    %16 = vector.broadcast %15 : vector<128x1xf32> to vector<128x128xf32>
    %17 = arith.addf %14, %16 : vector<128x128xf32>
    %18 = math.tanh %17 : vector<128x128xf32>
    %c0_12 = arith.constant 0 : index
    %c0_13 = arith.constant 0 : index
    %19 = vector.load %arg6[%c0_12, %c0_13] : memref<128x128xbf16, #tpu.memory_space<vmem>>, vector<128x128xbf16>
    %20 = arith.truncf %18 : vector<128x128xf32> to vector<128x128xbf16>
    %cst_14 = arith.constant dense<0.000000e+00> : vector<128x128xf32>
    %21 = tpu.matmul %19, %20, %cst_14 {dimension_numbers = #tpu.dot_dimension_numbers<[1], [0], [0], [1], [0, 0, 1, 1], [], []>} : vector<128x128xbf16>, vector<128x128xbf16>, vector<128x128xf32> -> vector<128x128xf32>
    %c0_15 = arith.constant 0 : index
    %c0_16 = arith.constant 0 : index
    %22 = vector.load %arg7[%c0_15, %c0_16] : memref<128x1xf32, #tpu.memory_space<vmem>>, vector<128x1xf32>
    %23 = vector.broadcast %22 : vector<128x1xf32> to vector<128x128xf32>
    %24 = arith.addf %21, %23 : vector<128x128xf32>
    %cst_17 = arith.constant dense<0xFF800000> : vector<128xf32>
    %25 = vector.multi_reduction <maximumf>, %24, %cst_17 [0] : vector<128x128xf32> to vector<128xf32>
    %26 = vector.shape_cast %25 : vector<128xf32> to vector<1x128xf32>
    %27 = vector.broadcast %26 : vector<1x128xf32> to vector<128x128xf32>
    %28 = arith.subf %24, %27 : vector<128x128xf32>
    %29 = math.exp %28 : vector<128x128xf32>
    %cst_18 = arith.constant dense<0.000000e+00> : vector<128xf32>
    %30 = vector.multi_reduction <add>, %29, %cst_18 [0] : vector<128x128xf32> to vector<128xf32>
    %31 = vector.shape_cast %30 : vector<128xf32> to vector<1x128xf32>
    %32 = math.log %31 : vector<1x128xf32>
    %33 = arith.addf %26, %32 : vector<1x128xf32>
    %34 = tpu.iota {dimensions = array<i32: 0>} : vector<128x128xi32>
    %35 = vector.broadcast %3 : vector<1x128xi32> to vector<128x128xi32>
    %36 = arith.cmpi eq, %34, %35 : vector<128x128xi32>
    %cst_19 = arith.constant 0.000000e+00 : f32
    %37 = vector.broadcast %cst_19 : f32 to vector<128x128xf32>
    %38 = arith.select %36, %24, %37 : vector<128x128xi1>, vector<128x128xf32>
    %cst_20 = arith.constant dense<0.000000e+00> : vector<128xf32>
    %39 = vector.multi_reduction <add>, %38, %cst_20 [0] : vector<128x128xf32> to vector<128xf32>
    %40 = vector.shape_cast %39 : vector<128xf32> to vector<1x128xf32>
    %41 = arith.subf %33, %40 : vector<1x128xf32>
    %c0_21 = arith.constant 0 : index
    %c0_22 = arith.constant 0 : index
    %c0_23 = arith.constant 0 : index
    %42 = vector.load %arg8[%c0_21, %c0_22, %c0_23] : memref<1x1x128xf32, #tpu.memory_space<vmem>>, vector<1x1x128xf32>
    %43 = vector.shape_cast %42 : vector<1x1x128xf32> to vector<1x128xf32>
    %44 = vector.shape_cast %41 : vector<1x128xf32> to vector<1x1x128xf32>
    tpu.vector_store %arg8[%c0_21, %c0_22, %c0_23], %44 {strides = array<i32>} : memref<1x1x128xf32, #tpu.memory_space<vmem>>, vector<1x1x128xf32>,
    return
  }
  func.func @transform_0(%arg0: i32) -> (i32, i32, i32) {
    %c0_i32 = arith.constant 0 : i32
    %c0_i32_0 = arith.constant 0 : i32
    %c0_i32_1 = arith.constant 0 : i32
    return %arg0, %c0_i32, %c0_i32_0 : i32, i32, i32
  }
  func.func @transform_1(%arg0: i32) -> (i32, i32, i32) {
    %c0_i32 = arith.constant 0 : i32
    %c0_i32_0 = arith.constant 0 : i32
    %c0_i32_1 = arith.constant 0 : i32
    return %arg0, %c0_i32, %c0_i32_0 : i32, i32, i32
  }
  func.func @transform_2(%arg0: i32) -> (i32, i32) {
    %c0_i32 = arith.constant 0 : i32
    %c0_i32_0 = arith.constant 0 : i32
    %c0_i32_1 = arith.constant 0 : i32
    return %c0_i32, %c0_i32_0 : i32, i32
  }
  func.func @transform_3(%arg0: i32) -> (i32, i32) {
    %c0_i32 = arith.constant 0 : i32
    %c0_i32_0 = arith.constant 0 : i32
    %c0_i32_1 = arith.constant 0 : i32
    return %c0_i32, %c0_i32_0 : i32, i32
  }
  func.func @transform_4(%arg0: i32) -> (i32, i32) {
    %c0_i32 = arith.constant 0 : i32
    %c0_i32_0 = arith.constant 0 : i32
    %c0_i32_1 = arith.constant 0 : i32
    return %c0_i32, %c0_i32_0 : i32, i32
  }
  func.func @transform_5(%arg0: i32) -> (i32, i32) {
    %c0_i32 = arith.constant 0 : i32
    %c0_i32_0 = arith.constant 0 : i32
    %c0_i32_1 = arith.constant 0 : i32
    return %c0_i32, %c0_i32_0 : i32, i32
  }
  func.func @transform_6(%arg0: i32) -> (i32, i32) {
    %c0_i32 = arith.constant 0 : i32
    %c0_i32_0 = arith.constant 0 : i32
    %c0_i32_1 = arith.constant 0 : i32
    return %c0_i32, %c0_i32_0 : i32, i32
  }
  func.func @transform_7(%arg0: i32) -> (i32, i32, i32) {
    %c0_i32 = arith.constant 0 : i32
    %c0_i32_0 = arith.constant 0 : i32
    %c0_i32_1 = arith.constant 0 : i32
    return %arg0, %c0_i32, %c0_i32_0 : i32, i32, i32
  }
}

</mosaic_0001>

<llo_original>
// kernel: model_forward.1
$region0: #{model_forward.1}
  #allocation0 [shape = 'u32[]', space=smem, size = 0x4, offset = 0x4, fixed_abs, tag = 'smem constant byte address 0x4 - core index']
  #allocation1 [shape = 'u32[72,128]{1,0:T(1,128)}', space=vmem, size = 0x9000, scoped, tag = 'internal scratch']
  %s0 = inlined_call_operand.vmem [shape: s32[2,1,128], index: 0, kind: input, shape index: {}]
  %s1 = inlined_call_operand.vmem [shape: s32[2,1,128], index: 1, kind: input, shape index: {}]
  %s2 = inlined_call_operand.vmem [shape: bf16[128,128], index: 2, kind: input, shape index: {}]
  %s3 = inlined_call_operand.vmem [shape: bf16[128,128], index: 3, kind: input, shape index: {}]
  %s4 = inlined_call_operand.vmem [shape: f32[128,1], index: 4, kind: input, shape index: {}]
  %s5 = inlined_call_operand.vmem [shape: bf16[128,128], index: 5, kind: input, shape index: {}]
  %s6 = inlined_call_operand.vmem [shape: f32[128,1], index: 6, kind: input, shape index: {}]
  %s7 = inlined_call_operand.vmem [shape: f32[2,1,128], index: 7, kind: output, shape index: {}]
  %s8 = sld [smem:[#allocation0]]
  $region61: #{model_forward.1} parent=0
    _
  %s10 = ssub.s32 1, %s8
  %s11 = scalar_select 0, %s10, %s8
  loop: start=0, step=1, limit=4
  $region2: #{model_forward.1} parent=0 // loop_pre_header
    _
  $region3: #{model_forward.1} parent=0 // loop_header
    %s13 = sphi 0, %s17
    %p14 = scmp.ge.s32.totalorder %s13, 4
    %s23 = sphi 0, %s25
    %s26 = sphi 0, %s23
    %s27 = sphi 0, %s26
    %s43 = sphi 0, %s27
    %s49 = sphi 0, %s51
    %s52 = sphi 0, %s49
    %s53 = sphi 0, %s52
    %s69 = sphi 0, %s53
    %s73 = sphi 0, %s73
    %s75 = sphi 0, %s73
    %s76 = sphi 0, %s75
    %s90 = sphi 0, %s76
    %s94 = sphi 0, %s94
    %s96 = sphi 0, %s94
    %s97 = sphi 0, %s96
    %s111 = sphi 0, %s97
    %s115 = sphi 0, %s115
    %s117 = sphi 0, %s115
    %s118 = sphi 0, %s117
    %s132 = sphi 0, %s118
    %s136 = sphi 0, %s136
    %s138 = sphi 0, %s136
    %s139 = sphi 0, %s138
    %s153 = sphi 0, %s139
    %s157 = sphi 0, %s157
    %s159 = sphi 0, %s157
    %s160 = sphi 0, %s159
    %s174 = sphi 0, %s160
    %s180 = sphi 0, %s182
    %s183 = sphi 0, %s180
    %s184 = sphi 0, %s183
    %s200 = sphi 0, %s184
  $region4: #{model_forward.1} parent=0 // loop_header_branch
    %16 = sbr.rel (%p14) target = $region8
  $region5: #{model_forward.1} parent=0 // loop_body
    %s18 = ssub.s32 %s13, 1
    %s19 = ssub.s32 %s13, 2
    %s20 = sadd.s32 %s13, 1
    %s21 = ssub.s32 %s13, %s20
    %p22 = scmp.eq.s32.totalorder %s21, 0
    %s24 = sadd.s32 %s23, 1
    %s25 = scalar_select %p22, %s23, %s24
    %p28 = pneg %p22
    %p29 = scmp.eq.s32.totalorder %s13, 1
    %p30 = por %p28, %p29
    %p31 = scmp.ne.s32.totalorder %s23, %s26
    %p32 = scmp.eq.s32.totalorder %s13, 0
    %p33 = por %p31, %p32
    %p34 = scmp.ne.s32.totalorder %s23, %s26
    %p35 = scmp.eq.s32.totalorder %s18, 1
    %p36 = por %p34, %p35
    %p37 = scmp.ne.s32.totalorder %s26, %s27
    %p38 = scmp.eq.s32.totalorder %s18, 0
    %p39 = por %p37, %p38
    %p40 = scmp.ne.s32.totalorder %s26, %s27
    %p41 = scmp.eq.s32.totalorder %s19, 1
    %p42 = por %p40, %p41
    %p44 = scmp.ne.s32.totalorder %s27, %s43
    %p45 = scmp.eq.s32.totalorder %s19, 0
    %p46 = por %p44, %p45
    %s47 = ssub.s32 %s13, %s20
    %p48 = scmp.eq.s32.totalorder %s47, 0
    %s50 = sadd.s32 %s49, 1
    %s51 = scalar_select %p48, %s49, %s50
    %p54 = pneg %p48
    %p55 = scmp.eq.s32.totalorder %s13, 1
    %p56 = por %p54, %p55
    %p57 = scmp.ne.s32.totalorder %s49, %s52
    %p58 = scmp.eq.s32.totalorder %s13, 0
    %p59 = por %p57, %p58
    %p60 = scmp.ne.s32.totalorder %s49, %s52
    %p61 = scmp.eq.s32.totalorder %s18, 1
    %p62 = por %p60, %p61
    %p63 = scmp.ne.s32.totalorder %s52, %s53
    %p64 = scmp.eq.s32.totalorder %s18, 0
    %p65 = por %p63, %p64
    %p66 = scmp.ne.s32.totalorder %s52, %s53
    %p67 = scmp.eq.s32.totalorder %s19, 1
    %p68 = por %p66, %p67
    %p70 = scmp.ne.s32.totalorder %s53, %s69
    %p71 = scmp.eq.s32.totalorder %s19, 0
    %p72 = por %p70, %p71
    %s74 = sadd.s32 %s73, 1
    %p77 = scmp.eq.s32.totalorder %s13, 1
    %p78 = scmp.ne.s32.totalorder %s73, %s75
    %p79 = scmp.eq.s32.totalorder %s13, 0
    %p80 = por %p78, %p79
    %p81 = scmp.ne.s32.totalorder %s73, %s75
    %p82 = scmp.eq.s32.totalorder %s18, 1
    %p83 = por %p81, %p82
    %p84 = scmp.ne.s32.totalorder %s75, %s76
    %p85 = scmp.eq.s32.totalorder %s18, 0
    %p86 = por %p84, %p85
    %p87 = scmp.ne.s32.totalorder %s75, %s76
    %p88 = scmp.eq.s32.totalorder %s19, 1
    %p89 = por %p87, %p88
    %p91 = scmp.ne.s32.totalorder %s76, %s90
    %p92 = scmp.eq.s32.totalorder %s19, 0
    %p93 = por %p91, %p92
    %s95 = sadd.s32 %s94, 1
    %p98 = scmp.eq.s32.totalorder %s13, 1
    %p99 = scmp.ne.s32.totalorder %s94, %s96
    %p100 = scmp.eq.s32.totalorder %s13, 0
    %p101 = por %p99, %p100
    %p102 = scmp.ne.s32.totalorder %s94, %s96
    %p103 = scmp.eq.s32.totalorder %s18, 1
    %p104 = por %p102, %p103
    %p105 = scmp.ne.s32.totalorder %s96, %s97
    %p106 = scmp.eq.s32.totalorder %s18, 0
    %p107 = por %p105, %p106
    %p108 = scmp.ne.s32.totalorder %s96, %s97
    %p109 = scmp.eq.s32.totalorder %s19, 1
    %p110 = por %p108, %p109
    %p112 = scmp.ne.s32.totalorder %s97, %s111
    %p113 = scmp.eq.s32.totalorder %s19, 0
    %p114 = por %p112, %p113
    %s116 = sadd.s32 %s115, 1
    %p119 = scmp.eq.s32.totalorder %s13, 1
    %p120 = scmp.ne.s32.totalorder %s115, %s117
    %p121 = scmp.eq.s32.totalorder %s13, 0
    %p122 = por %p120, %p121
    %p123 = scmp.ne.s32.totalorder %s115, %s117
    %p124 = scmp.eq.s32.totalorder %s18, 1
    %p125 = por %p123, %p124
    %p126 = scmp.ne.s32.totalorder %s117, %s118
    %p127 = scmp.eq.s32.totalorder %s18, 0
    %p128 = por %p126, %p127
    %p129 = scmp.ne.s32.totalorder %s117, %s118
    %p130 = scmp.eq.s32.totalorder %s19, 1
    %p131 = por %p129, %p130
    %p133 = scmp.ne.s32.totalorder %s118, %s132
    %p134 = scmp.eq.s32.totalorder %s19, 0
    %p135 = por %p133, %p134
    %s137 = sadd.s32 %s136, 1
    %p140 = scmp.eq.s32.totalorder %s13, 1
    %p141 = scmp.ne.s32.totalorder %s136, %s138
    %p142 = scmp.eq.s32.totalorder %s13, 0
    %p143 = por %p141, %p142
    %p144 = scmp.ne.s32.totalorder %s136, %s138
    %p145 = scmp.eq.s32.totalorder %s18, 1
    %p146 = por %p144, %p145
    %p147 = scmp.ne.s32.totalorder %s138, %s139
    %p148 = scmp.eq.s32.totalorder %s18, 0
    %p149 = por %p147, %p148
    %p150 = scmp.ne.s32.totalorder %s138, %s139
    %p151 = scmp.eq.s32.totalorder %s19, 1
    %p152 = por %p150, %p151
    %p154 = scmp.ne.s32.totalorder %s139, %s153
    %p155 = scmp.eq.s32.totalorder %s19, 0
    %p156 = por %p154, %p155
    %s158 = sadd.s32 %s157, 1
    %p161 = scmp.eq.s32.totalorder %s13, 1
    %p162 = scmp.ne.s32.totalorder %s157, %s159
    %p163 = scmp.eq.s32.totalorder %s13, 0
    %p164 = por %p162, %p163
    %p165 = scmp.ne.s32.totalorder %s157, %s159
    %p166 = scmp.eq.s32.totalorder %s18, 1
    %p167 = por %p165, %p166
    %p168 = scmp.ne.s32.totalorder %s159, %s160
    %p169 = scmp.eq.s32.totalorder %s18, 0
    %p170 = por %p168, %p169
    %p171 = scmp.ne.s32.totalorder %s159, %s160
    %p172 = scmp.eq.s32.totalorder %s19, 1
    %p173 = por %p171, %p172
    %p175 = scmp.ne.s32.totalorder %s160, %s174
    %p176 = scmp.eq.s32.totalorder %s19, 0
    %p177 = por %p175, %p176
    %s178 = ssub.s32 %s13, %s20
    %p179 = scmp.eq.s32.totalorder %s178, 0
    %s181 = sadd.s32 %s180, 1
    %s182 = scalar_select %p179, %s180, %s181
    %p185 = pneg %p179
    %p186 = scmp.eq.s32.totalorder %s13, 1
    %p187 = por %p185, %p186
    %p188 = scmp.ne.s32.totalorder %s180, %s183
    %p189 = scmp.eq.s32.totalorder %s13, 0
    %p190 = por %p188, %p189
    %p191 = scmp.ne.s32.totalorder %s180, %s183
    %p192 = scmp.eq.s32.totalorder %s18, 1
    %p193 = por %p191, %p192
    %p194 = scmp.ne.s32.totalorder %s183, %s184
    %p195 = scmp.eq.s32.totalorder %s18, 0
    %p196 = por %p194, %p195
    %p197 = scmp.ne.s32.totalorder %s183, %s184
    %p198 = scmp.eq.s32.totalorder %s19, 1
    %p199 = por %p197, %p198
    %p201 = scmp.ne.s32.totalorder %s184, %s200
    %p202 = scmp.eq.s32.totalorder %s19, 0
    %p203 = por %p201, %p202
    %p204 = scmp.le.s32.totalorder 1, %s13
    %p205 = scmp.lt.s32.totalorder %s13, 3
    %p206 = pnand %p204, %p205
    %p207 = pneg %p206
    // Predicated region
    $region9: #{model_forward.1} parent=5 // pred_check
      _
    $region10: #{model_forward.1} parent=5 // pred_check_branch
      %209 = sbr.rel (%p206) target = $region12
    $region11: #{model_forward.1} parent=5 // pred_region
      %s210 = ssub.s32 %s13, 1
      // Predicated region
      $region13: #{model_forward.1} parent=11 // pred_check
        %p211 = pneg %p86
      $region14: #{model_forward.1} parent=11 // pred_check_branch
        %213 = sbr.rel (%p211) target = $region16
      $region15: #{model_forward.1} parent=11 // pred_region
        _
      $region16: #{model_forward.1} parent=11 // pred_fallthru
        _
      // Predicated region
      $region17: #{model_forward.1} parent=11 // pred_check
        %p214 = pneg %p107
      $region18: #{model_forward.1} parent=11 // pred_check_branch
        %216 = sbr.rel (%p214) target = $region20
      $region19: #{model_forward.1} parent=11 // pred_region
        _
      $region20: #{model_forward.1} parent=11 // pred_fallthru
        _
      // Predicated region
      $region21: #{model_forward.1} parent=11 // pred_check
        %p217 = pneg %p128
      $region22: #{model_forward.1} parent=11 // pred_check_branch
        %219 = sbr.rel (%p217) target = $region24
      $region23: #{model_forward.1} parent=11 // pred_region
        _
      $region24: #{model_forward.1} parent=11 // pred_fallthru
        _
      // Predicated region
      $region25: #{model_forward.1} parent=11 // pred_check
        %p220 = pneg %p149
      $region26: #{model_forward.1} parent=11 // pred_check_branch
        %222 = sbr.rel (%p220) target = $region28
      $region27: #{model_forward.1} parent=11 // pred_region
        _
      $region28: #{model_forward.1} parent=11 // pred_fallthru
        _
      // Predicated region
      $region29: #{model_forward.1} parent=11 // pred_check
        %p223 = pneg %p170
      $region30: #{model_forward.1} parent=11 // pred_check_branch
        %225 = sbr.rel (%p223) target = $region32
      $region31: #{model_forward.1} parent=11 // pred_region
        _
      $region32: #{model_forward.1} parent=11 // pred_fallthru
        _
    $region12: #{model_forward.1} parent=5 // pred_fallthru
      _
    %p226 = scmp.lt.s32.totalorder %s13, 2
    // Predicated region
    $region33: #{model_forward.1} parent=5 // pred_check
      %p227 = pneg %p226
    $region34: #{model_forward.1} parent=5 // pred_check_branch
      %229 = sbr.rel (%p227) target = $region36
    $region35: #{model_forward.1} parent=5 // pred_region
      // Predicated region
      $region37: #{model_forward.1} parent=35 // pred_check
        %p230 = pneg %p33
      $region38: #{model_forward.1} parent=35 // pred_check_branch
        %232 = sbr.rel (%p230) target = $region40
      $region39: #{model_forward.1} parent=35 // pred_region
        %p233 = scmp.lt.s32.totalorder %s13, 1
        %s234 = scalar_select %p233, %s13, 1
        %s235 = scalar_lea.vmem %s0, %s234
      $region40: #{model_forward.1} parent=35 // pred_fallthru
        _
      // Predicated region
      $region41: #{model_forward.1} parent=35 // pred_check
        %p236 = pneg %p59
      $region42: #{model_forward.1} parent=35 // pred_check_branch
        %238 = sbr.rel (%p236) target = $region44
      $region43: #{model_forward.1} parent=35 // pred_region
        %p239 = scmp.lt.s32.totalorder %s13, 1
        %s240 = scalar_select %p239, %s13, 1
        %s241 = scalar_lea.vmem %s1, %s240
      $region44: #{model_forward.1} parent=35 // pred_fallthru
        _
    $region36: #{model_forward.1} parent=5 // pred_fallthru
      _
    %p242 = scmp.le.s32.totalorder 1, %s13
    %p243 = scmp.lt.s32.totalorder %s13, 3
    %p244 = pnand %p242, %p243
    %p245 = pneg %p244
    // Predicated region
    $region45: #{model_forward.1} parent=5 // pred_check
      _
    $region46: #{model_forward.1} parent=5 // pred_check_branch
      %247 = sbr.rel (%p244) target = $region48
    $region47: #{model_forward.1} parent=5 // pred_region
      %s248 = ssub.s32 %s13, 1
      %p249 = scmp.lt.s32.totalorder %s18, 1
      %s250 = scalar_select %p249, %s18, 1
      %s251 = scalar_lea.vmem %s0, %s250
      %p252 = pneg %p39
      %p253 = pneg %p36
      %p254 = scmp.lt.s32.totalorder %s18, 1
      %s255 = scalar_select %p254, %s18, 1
      %s256 = scalar_lea.vmem %s1, %s255
      %p257 = pneg %p65
      %p258 = pneg %p62
      %p259 = pneg %p86
      %p260 = pneg %p83
      %p261 = pneg %p107
      %p262 = pneg %p104
      %p263 = pneg %p128
      %p264 = pneg %p125
      %p265 = pneg %p149
      %p266 = pneg %p146
      %p267 = pneg %p170
      %p268 = pneg %p167
      %p269 = pneg %p196
      %p270 = pneg %p193
      %p271 = scmp.lt.s32.totalorder %s18, 1
      %s272 = scalar_select %p271, %s18, 1
      %s273 = scalar_lea.vmem %s7, %s272
      %p274 = scmp.lt.s32.totalorder %s18, 1
      %s275 = scalar_select %p274, %s18, 1
      %s276 = scalar_lea.vmem %s0, %s275
      %p277 = scmp.lt.s32.totalorder %s18, 1
      %s278 = scalar_select %p277, %s18, 1
      %s279 = scalar_lea.vmem %s1, %s278
      %p280 = scmp.lt.s32.totalorder %s18, 1
      %s281 = scalar_select %p280, %s18, 1
      %s282 = scalar_lea.vmem %s7, %s281
      %v283 = vld [vmem:[%s276] sm:$0x1]
      %v284 = vld [vmem:[%s279] sm:$0x1]
      %v285 = vlaneseq
      %v286 = vshrl.u32 %v285, 7
      %v287 = vadd.s32 %v286, 8
      %v288 = vadd.s32 %v286, 16
      %v289 = vadd.s32 %v286, 24
      %v290 = vadd.s32 %v286, 32
      %v291 = vadd.s32 %v286, 40
      %v292 = vadd.s32 %v286, 48
      %v293 = vadd.s32 %v286, 56
      %v294 = vadd.s32 %v286, 64
      %v295 = vadd.s32 %v286, 72
      %v296 = vadd.s32 %v286, 80
      %v297 = vadd.s32 %v286, 88
      %v298 = vadd.s32 %v286, 96
      %v299 = vadd.s32 %v286, 104
      %v300 = vadd.s32 %v286, 112
      %v301 = vadd.s32 %v286, 120
      %v302 = vperm.slane %v283, 0
      %vm303 = vcmp.eq.s32.totalorder %v286, %v302
      %vm304 = vcmp.eq.s32.totalorder %v287, %v302
      %vm305 = vcmp.eq.s32.totalorder %v288, %v302
      %vm306 = vcmp.eq.s32.totalorder %v289, %v302
      %vm307 = vcmp.eq.s32.totalorder %v290, %v302
      %vm308 = vcmp.eq.s32.totalorder %v291, %v302
      %vm309 = vcmp.eq.s32.totalorder %v292, %v302
      %vm310 = vcmp.eq.s32.totalorder %v293, %v302
      %vm311 = vcmp.eq.s32.totalorder %v294, %v302
      %vm312 = vcmp.eq.s32.totalorder %v295, %v302
      %vm313 = vcmp.eq.s32.totalorder %v296, %v302
      %vm314 = vcmp.eq.s32.totalorder %v297, %v302
      %vm315 = vcmp.eq.s32.totalorder %v298, %v302
      %vm316 = vcmp.eq.s32.totalorder %v299, %v302
      %vm317 = vcmp.eq.s32.totalorder %v300, %v302
      %vm318 = vcmp.eq.s32.totalorder %v301, %v302
      %v319 = vsel %vm303, 1, 0
      %v320 = vsel %vm304, 1, 0
      %v321 = vsel %vm305, 1, 0
      %v322 = vsel %vm306, 1, 0
      %v323 = vsel %vm307, 1, 0
      %v324 = vsel %vm308, 1, 0
      %v325 = vsel %vm309, 1, 0
      %v326 = vsel %vm310, 1, 0
      %v327 = vsel %vm311, 1, 0
      %v328 = vsel %vm312, 1, 0
      %v329 = vsel %vm313, 1, 0
      %v330 = vsel %vm314, 1, 0
      %v331 = vsel %vm315, 1, 0
      %v332 = vsel %vm316, 1, 0
      %v333 = vsel %vm317, 1, 0
      %v334 = vsel %vm318, 1, 0
      %v335 = vcvt.s32.f32 %v319
      %v336 = vcvt.s32.f32 %v320
      %v337 = vcvt.s32.f32 %v321
      %v338 = vcvt.s32.f32 %v322
      %v339 = vcvt.s32.f32 %v323
      %v340 = vcvt.s32.f32 %v324
      %v341 = vcvt.s32.f32 %v325
      %v342 = vcvt.s32.f32 %v326
      %v343 = vcvt.s32.f32 %v327
      %v344 = vcvt.s32.f32 %v328
      %v345 = vcvt.s32.f32 %v329
      %v346 = vcvt.s32.f32 %v330
      %v347 = vcvt.s32.f32 %v331
      %v348 = vcvt.s32.f32 %v332
      %v349 = vcvt.s32.f32 %v333
      %v350 = vcvt.s32.f32 %v334
      %v351 = vpack.c.bf16 %v336, %v335
      %v352 = vpack.c.bf16 %v338, %v337
      %v353 = vpack.c.bf16 %v340, %v339
      %v354 = vpack.c.bf16 %v342, %v341
      %v355 = vpack.c.bf16 %v344, %v343
      %v356 = vpack.c.bf16 %v346, %v345
      %v357 = vpack.c.bf16 %v348, %v347
      %v358 = vpack.c.bf16 %v350, %v349
      %v359 = vld [vmem:[%s2] sm:$0xf]
      %v360 = vld [vmem:[%s2 + $0x4] sm:$0xf]
      %v361 = vld [vmem:[%s2 + $0x8] sm:$0xf]
      %v362 = vld [vmem:[%s2 + $0xc] sm:$0xf]
      %v363 = vld [vmem:[%s2 + $0x10] sm:$0xf]
      %v364 = vld [vmem:[%s2 + $0x14] sm:$0xf]
      %v365 = vld [vmem:[%s2 + $0x18] sm:$0xf]
      %v366 = vld [vmem:[%s2 + $0x1c] sm:$0xf]
      %v367 = vld [vmem:[%s2 + $0x20] sm:$0xf]
      %v368 = vld [vmem:[%s2 + $0x24] sm:$0xf]
      %v369 = vld [vmem:[%s2 + $0x28] sm:$0xf]
      %v370 = vld [vmem:[%s2 + $0x2c] sm:$0xf]
      %v371 = vld [vmem:[%s2 + $0x30] sm:$0xf]
      %v372 = vld [vmem:[%s2 + $0x34] sm:$0xf]
      %v373 = vld [vmem:[%s2 + $0x38] sm:$0xf]
      %v374 = vld [vmem:[%s2 + $0x3c] sm:$0xf]
      %v391 = vunpack.c.l.b16 %v359
      %v392 = vunpack.c.l.b16 %v360
      %v393 = vunpack.c.l.b16 %v361
      %v394 = vunpack.c.l.b16 %v362
      %v395 = vunpack.c.l.b16 %v363
      %v396 = vunpack.c.l.b16 %v364
      %v397 = vunpack.c.l.b16 %v365
      %v398 = vunpack.c.l.b16 %v366
      %v399 = vunpack.c.l.b16 %v367
      %v400 = vunpack.c.l.b16 %v368
      %v401 = vunpack.c.l.b16 %v369
      %v402 = vunpack.c.l.b16 %v370
      %v403 = vunpack.c.l.b16 %v371
      %v404 = vunpack.c.l.b16 %v372
      %v405 = vunpack.c.l.b16 %v373
      %v406 = vunpack.c.l.b16 %v374
      %v407 = vpack.c.b16 %v392, %v391
      %v408 = vpack.c.b16 %v394, %v393
      %v409 = vpack.c.b16 %v396, %v395
      %v410 = vpack.c.b16 %v398, %v397
      %v411 = vpack.c.b16 %v400, %v399
      %v412 = vpack.c.b16 %v402, %v401
      %v413 = vpack.c.b16 %v404, %v403
      %v414 = vpack.c.b16 %v406, %v405
      %423 = vmatpush.bf16.msra.mxu0 %v358
      %424 = vmatpush.bf16.msra.mxu0 %v357
      %425 = vmatpush.bf16.msra.mxu0 %v356
      %426 = vmatpush.bf16.msra.mxu0 %v355
      %427 = vmatpush.bf16.msra.mxu0 %v354
      %428 = vmatpush.bf16.msra.mxu0 %v353
      %429 = vmatpush.bf16.msra.mxu0 %v352
      %430 = vmatpush.bf16.msra.mxu0 %v351
      %431 = vmatmul.bf16.gmra.mxu0 %v407
      %v432 = vpop.f32.mrf.mxu0
      %v433 = vadd.f32 0.0, %v432
      %v434 = vpop.f32.mrf.mxu0
      %v435 = vadd.f32 0.0, %v434
      %436 = vmatmul.bf16.gmra.mxu0 %v408
      %v437 = vpop.f32.mrf.mxu0
      %v438 = vadd.f32 0.0, %v437
      %v439 = vpop.f32.mrf.mxu0
      %v440 = vadd.f32 0.0, %v439
      %441 = vmatmul.bf16.gmra.mxu0 %v409
      %v442 = vpop.f32.mrf.mxu0
      %v443 = vadd.f32 0.0, %v442
      %v444 = vpop.f32.mrf.mxu0
      %v445 = vadd.f32 0.0, %v444
      %446 = vmatmul.bf16.gmra.mxu0 %v410
      %v447 = vpop.f32.mrf.mxu0
      %v448 = vadd.f32 0.0, %v447
      %v449 = vpop.f32.mrf.mxu0
      %v450 = vadd.f32 0.0, %v449
      %451 = vmatmul.bf16.gmra.mxu0 %v411
      %v452 = vpop.f32.mrf.mxu0
      %v453 = vadd.f32 0.0, %v452
      %v454 = vpop.f32.mrf.mxu0
      %v455 = vadd.f32 0.0, %v454
      %456 = vmatmul.bf16.gmra.mxu0 %v412
      %v457 = vpop.f32.mrf.mxu0
      %v458 = vadd.f32 0.0, %v457
      %v459 = vpop.f32.mrf.mxu0
      %v460 = vadd.f32 0.0, %v459
      %461 = vmatmul.bf16.gmra.mxu0 %v413
      %v462 = vpop.f32.mrf.mxu0
      %v463 = vadd.f32 0.0, %v462
      %v464 = vpop.f32.mrf.mxu0
      %v465 = vadd.f32 0.0, %v464
      %466 = vmatmul.bf16.gmra.mxu0 %v414
      %v467 = vpop.f32.mrf.mxu0
      %v468 = vadd.f32 0.0, %v467
      %v469 = vpop.f32.mrf.mxu0
      %v470 = vadd.f32 0.0, %v469
      %471 = vdwg.mxu0
      %v472 = vpack.c.bf16 %v435, %v433
      %v473 = vpack.c.bf16 %v440, %v438
      %v474 = vpack.c.bf16 %v445, %v443
      %v475 = vpack.c.bf16 %v450, %v448
      %v476 = vpack.c.bf16 %v455, %v453
      %v477 = vpack.c.bf16 %v460, %v458
      %v478 = vpack.c.bf16 %v465, %v463
      %v479 = vpack.c.bf16 %v470, %v468
      %v480 = vld [vmem:[%s3] sm:$0xf]
      %v481 = vld [vmem:[%s3 + $0x4] sm:$0xf]
      %v482 = vld [vmem:[%s3 + $0x8] sm:$0xf]
      %v483 = vld [vmem:[%s3 + $0xc] sm:$0xf]
      %v484 = vld [vmem:[%s3 + $0x10] sm:$0xf]
      %v485 = vld [vmem:[%s3 + $0x14] sm:$0xf]
      %v486 = vld [vmem:[%s3 + $0x18] sm:$0xf]
      %v487 = vld [vmem:[%s3 + $0x1c] sm:$0xf]
      %v488 = vld [vmem:[%s3 + $0x20] sm:$0xf]
      %v489 = vld [vmem:[%s3 + $0x24] sm:$0xf]
      %v490 = vld [vmem:[%s3 + $0x28] sm:$0xf]
      %v491 = vld [vmem:[%s3 + $0x2c] sm:$0xf]
      %v492 = vld [vmem:[%s3 + $0x30] sm:$0xf]
      %v493 = vld [vmem:[%s3 + $0x34] sm:$0xf]
      %v494 = vld [vmem:[%s3 + $0x38] sm:$0xf]
      %v495 = vld [vmem:[%s3 + $0x3c] sm:$0xf]
      %v496 = vld [vmem:[%s4] sm:$0xff]
      %v497 = vld [vmem:[%s4 + $0x8] sm:$0xff]
      %v498 = vld [vmem:[%s4 + $0x10] sm:$0xff]
      %v499 = vld [vmem:[%s4 + $0x18] sm:$0xff]
      %v500 = vld [vmem:[%s4 + $0x20] sm:$0xff]
      %v501 = vld [vmem:[%s4 + $0x28] sm:$0xff]
      %v502 = vld [vmem:[%s4 + $0x30] sm:$0xff]
      %v503 = vld [vmem:[%s4 + $0x38] sm:$0xff]
      %v504 = vld [vmem:[%s4 + $0x40] sm:$0xff]
      %v505 = vld [vmem:[%s4 + $0x48] sm:$0xff]
      %v506 = vld [vmem:[%s4 + $0x50] sm:$0xff]
      %v507 = vld [vmem:[%s4 + $0x58] sm:$0xff]
      %v508 = vld [vmem:[%s4 + $0x60] sm:$0xff]
      %v509 = vld [vmem:[%s4 + $0x68] sm:$0xff]
      %v510 = vld [vmem:[%s4 + $0x70] sm:$0xff]
      %v511 = vld [vmem:[%s4 + $0x78] sm:$0xff]
      %513 = vset.pattern.permute.xlu0 0
      %514 = vperm.xlu0 %513, %v496
      %v515 = vpop.permute.xlu0 %514
      %518 = vset.pattern.permute.xlu0 0
      %519 = vperm.xlu0 %518, %v497
      %v520 = vpop.permute.xlu0 %519
      %523 = vset.pattern.permute.xlu0 0
      %524 = vperm.xlu0 %523, %v498
      %v525 = vpop.permute.xlu0 %524
      %528 = vset.pattern.permute.xlu0 0
      %529 = vperm.xlu0 %528, %v499
      %v530 = vpop.permute.xlu0 %529
      %533 = vset.pattern.permute.xlu0 0
      %534 = vperm.xlu0 %533, %v500
      %v535 = vpop.permute.xlu0 %534
      %538 = vset.pattern.permute.xlu0 0
      %539 = vperm.xlu0 %538, %v501
      %v540 = vpop.permute.xlu0 %539
      %543 = vset.pattern.permute.xlu0 0
      %544 = vperm.xlu0 %543, %v502
      %v545 = vpop.permute.xlu0 %544
      %548 = vset.pattern.permute.xlu0 0
      %549 = vperm.xlu0 %548, %v503
      %v550 = vpop.permute.xlu0 %549
      %553 = vset.pattern.permute.xlu0 0
      %554 = vperm.xlu0 %553, %v504
      %v555 = vpop.permute.xlu0 %554
      %558 = vset.pattern.permute.xlu0 0
      %559 = vperm.xlu0 %558, %v505
      %v560 = vpop.permute.xlu0 %559
      %563 = vset.pattern.permute.xlu0 0
      %564 = vperm.xlu0 %563, %v506
      %v565 = vpop.permute.xlu0 %564
      %568 = vset.pattern.permute.xlu0 0
      %569 = vperm.xlu0 %568, %v507
      %v570 = vpop.permute.xlu0 %569
      %573 = vset.pattern.permute.xlu0 0
      %574 = vperm.xlu0 %573, %v508
      %v575 = vpop.permute.xlu0 %574
      %578 = vset.pattern.permute.xlu0 0
      %579 = vperm.xlu0 %578, %v509
      %v580 = vpop.permute.xlu0 %579
      %583 = vset.pattern.permute.xlu0 0
      %584 = vperm.xlu0 %583, %v510
      %v585 = vpop.permute.xlu0 %584
      %588 = vset.pattern.permute.xlu0 0
      %589 = vperm.xlu0 %588, %v511
      %v590 = vpop.permute.xlu0 %589
      %v608 = vunpack.c.l.b16 %v480
      %v609 = vunpack.c.l.b16 %v481
      %v610 = vunpack.c.l.b16 %v482
      %v611 = vunpack.c.l.b16 %v483
      %v612 = vunpack.c.l.b16 %v484
      %v613 = vunpack.c.l.b16 %v485
      %v614 = vunpack.c.l.b16 %v486
      %v615 = vunpack.c.l.b16 %v487
      %v616 = vunpack.c.l.b16 %v488
      %v617 = vunpack.c.l.b16 %v489
      %v618 = vunpack.c.l.b16 %v490
      %v619 = vunpack.c.l.b16 %v491
      %v620 = vunpack.c.l.b16 %v492
      %v621 = vunpack.c.l.b16 %v493
      %v622 = vunpack.c.l.b16 %v494
      %v623 = vunpack.c.l.b16 %v495
      %v624 = vpack.c.b16 %v609, %v608
      %v625 = vpack.c.b16 %v611, %v610
      %v626 = vpack.c.b16 %v613, %v612
      %v627 = vpack.c.b16 %v615, %v614
      %v628 = vpack.c.b16 %v617, %v616
      %v629 = vpack.c.b16 %v619, %v618
      %v630 = vpack.c.b16 %v621, %v620
      %v631 = vpack.c.b16 %v623, %v622
      %640 = vmatpush.bf16.msra.mxu0 %v479
      %641 = vmatpush.bf16.msra.mxu0 %v478
      %642 = vmatpush.bf16.msra.mxu0 %v477
      %643 = vmatpush.bf16.msra.mxu0 %v476
      %644 = vmatpush.bf16.msra.mxu0 %v475
      %645 = vmatpush.bf16.msra.mxu0 %v474
      %646 = vmatpush.bf16.msra.mxu0 %v473
      %647 = vmatpush.bf16.msra.mxu0 %v472
      %648 = vmatmul.bf16.gmra.mxu0 %v624
      %v649 = vpop.f32.mrf.mxu0
      %v650 = vadd.f32 %v515, %v649
      %v651 = vpop.f32.mrf.mxu0
      %v652 = vadd.f32 %v520, %v651
      %653 = vmatmul.bf16.gmra.mxu0 %v625
      %v654 = vpop.f32.mrf.mxu0
      %v655 = vadd.f32 %v525, %v654
      %v656 = vpop.f32.mrf.mxu0
      %v657 = vadd.f32 %v530, %v656
      %658 = vmatmul.bf16.gmra.mxu0 %v626
      %v659 = vpop.f32.mrf.mxu0
      %v660 = vadd.f32 %v535, %v659
      %v661 = vpop.f32.mrf.mxu0
      %v662 = vadd.f32 %v540, %v661
      %663 = vmatmul.bf16.gmra.mxu0 %v627
      %v664 = vpop.f32.mrf.mxu0
      %v665 = vadd.f32 %v545, %v664
      %v666 = vpop.f32.mrf.mxu0
      %v667 = vadd.f32 %v550, %v666
      %668 = vmatmul.bf16.gmra.mxu0 %v628
      %v669 = vpop.f32.mrf.mxu0
      %v670 = vadd.f32 %v555, %v669
      %v671 = vpop.f32.mrf.mxu0
      %v672 = vadd.f32 %v560, %v671
      %673 = vmatmul.bf16.gmra.mxu0 %v629
      %v674 = vpop.f32.mrf.mxu0
      %v675 = vadd.f32 %v565, %v674
      %v676 = vpop.f32.mrf.mxu0
      %v677 = vadd.f32 %v570, %v676
      %678 = vmatmul.bf16.gmra.mxu0 %v630
      %v679 = vpop.f32.mrf.mxu0
      %v680 = vadd.f32 %v575, %v679
      %v681 = vpop.f32.mrf.mxu0
      %v682 = vadd.f32 %v580, %v681
      %683 = vmatmul.bf16.gmra.mxu0 %v631
      %v684 = vpop.f32.mrf.mxu0
      %v685 = vadd.f32 %v585, %v684
      %v686 = vpop.f32.mrf.mxu0
      %v687 = vadd.f32 %v590, %v686
      %688 = vdwg.mxu0
      %v689 = vtanh.pop %v650
      %v690 = vtanh.pop %v652
      %v691 = vtanh.pop %v655
      %v692 = vtanh.pop %v657
      %v693 = vtanh.pop %v660
      %v694 = vtanh.pop %v662
      %v695 = vtanh.pop %v665
      %v696 = vtanh.pop %v667
      %v697 = vtanh.pop %v670
      %v698 = vtanh.pop %v672
      %v699 = vtanh.pop %v675
      %v700 = vtanh.pop %v677
      %v701 = vtanh.pop %v680
      %v702 = vtanh.pop %v682
      %v703 = vtanh.pop %v685
      %v704 = vtanh.pop %v687
      %v705 = vld [vmem:[%s5] sm:$0xf]
      %v706 = vld [vmem:[%s5 + $0x4] sm:$0xf]
      %v707 = vld [vmem:[%s5 + $0x8] sm:$0xf]
      %v708 = vld [vmem:[%s5 + $0xc] sm:$0xf]
      %v709 = vld [vmem:[%s5 + $0x10] sm:$0xf]
      %v710 = vld [vmem:[%s5 + $0x14] sm:$0xf]
      %v711 = vld [vmem:[%s5 + $0x18] sm:$0xf]
      %v712 = vld [vmem:[%s5 + $0x1c] sm:$0xf]
      %v713 = vld [vmem:[%s5 + $0x20] sm:$0xf]
      %v714 = vld [vmem:[%s5 + $0x24] sm:$0xf]
      %v715 = vld [vmem:[%s5 + $0x28] sm:$0xf]
      %v716 = vld [vmem:[%s5 + $0x2c] sm:$0xf]
      %v717 = vld [vmem:[%s5 + $0x30] sm:$0xf]
      %v718 = vld [vmem:[%s5 + $0x34] sm:$0xf]
      %v719 = vld [vmem:[%s5 + $0x38] sm:$0xf]
      %v720 = vld [vmem:[%s5 + $0x3c] sm:$0xf]
      %v721 = vpack.c.bf16 %v690, %v689
      %v722 = vpack.c.bf16 %v692, %v691
      %v723 = vpack.c.bf16 %v694, %v693
      %v724 = vpack.c.bf16 %v696, %v695
      %v725 = vpack.c.bf16 %v698, %v697
      %v726 = vpack.c.bf16 %v700, %v699
      %v727 = vpack.c.bf16 %v702, %v701
      %v728 = vpack.c.bf16 %v704, %v703
      %v729 = vld [vmem:[%s6] sm:$0xff]
      %v730 = vld [vmem:[%s6 + $0x8] sm:$0xff]
      %v731 = vld [vmem:[%s6 + $0x10] sm:$0xff]
      %v732 = vld [vmem:[%s6 + $0x18] sm:$0xff]
      %v733 = vld [vmem:[%s6 + $0x20] sm:$0xff]
      %v734 = vld [vmem:[%s6 + $0x28] sm:$0xff]
      %v735 = vld [vmem:[%s6 + $0x30] sm:$0xff]
      %v736 = vld [vmem:[%s6 + $0x38] sm:$0xff]
      %v737 = vld [vmem:[%s6 + $0x40] sm:$0xff]
      %v738 = vld [vmem:[%s6 + $0x48] sm:$0xff]
      %v739 = vld [vmem:[%s6 + $0x50] sm:$0xff]
      %v740 = vld [vmem:[%s6 + $0x58] sm:$0xff]
      %v741 = vld [vmem:[%s6 + $0x60] sm:$0xff]
      %v742 = vld [vmem:[%s6 + $0x68] sm:$0xff]
      %v743 = vld [vmem:[%s6 + $0x70] sm:$0xff]
      %v744 = vld [vmem:[%s6 + $0x78] sm:$0xff]
      %746 = vset.pattern.permute.xlu0 0
      %747 = vperm.xlu0 %746, %v729
      %v748 = vpop.permute.xlu0 %747
      %751 = vset.pattern.permute.xlu0 0
      %752 = vperm.xlu0 %751, %v730
      %v753 = vpop.permute.xlu0 %752
      %756 = vset.pattern.permute.xlu0 0
      %757 = vperm.xlu0 %756, %v731
      %v758 = vpop.permute.xlu0 %757
      %761 = vset.pattern.permute.xlu0 0
      %762 = vperm.xlu0 %761, %v732
      %v763 = vpop.permute.xlu0 %762
      %766 = vset.pattern.permute.xlu0 0
      %767 = vperm.xlu0 %766, %v733
      %v768 = vpop.permute.xlu0 %767
      %771 = vset.pattern.permute.xlu0 0
      %772 = vperm.xlu0 %771, %v734
      %v773 = vpop.permute.xlu0 %772
      %776 = vset.pattern.permute.xlu0 0
      %777 = vperm.xlu0 %776, %v735
      %v778 = vpop.permute.xlu0 %777
      %781 = vset.pattern.permute.xlu0 0
      %782 = vperm.xlu0 %781, %v736
      %v783 = vpop.permute.xlu0 %782
      %786 = vset.pattern.permute.xlu0 0
      %787 = vperm.xlu0 %786, %v737
      %v788 = vpop.permute.xlu0 %787
      %791 = vset.pattern.permute.xlu0 0
      %792 = vperm.xlu0 %791, %v738
      %v793 = vpop.permute.xlu0 %792
      %796 = vset.pattern.permute.xlu0 0
      %797 = vperm.xlu0 %796, %v739
      %v798 = vpop.permute.xlu0 %797
      %801 = vset.pattern.permute.xlu0 0
      %802 = vperm.xlu0 %801, %v740
      %v803 = vpop.permute.xlu0 %802
      %806 = vset.pattern.permute.xlu0 0
      %807 = vperm.xlu0 %806, %v741
      %v808 = vpop.permute.xlu0 %807
      %811 = vset.pattern.permute.xlu0 0
      %812 = vperm.xlu0 %811, %v742
      %v813 = vpop.permute.xlu0 %812
      %816 = vset.pattern.permute.xlu0 0
      %817 = vperm.xlu0 %816, %v743
      %v818 = vpop.permute.xlu0 %817
      %821 = vset.pattern.permute.xlu0 0
      %822 = vperm.xlu0 %821, %v744
      %v823 = vpop.permute.xlu0 %822
      %v841 = vunpack.c.l.b16 %v705
      %v842 = vunpack.c.l.b16 %v706
      %v843 = vunpack.c.l.b16 %v707
      %v844 = vunpack.c.l.b16 %v708
      %v845 = vunpack.c.l.b16 %v709
      %v846 = vunpack.c.l.b16 %v710
      %v847 = vunpack.c.l.b16 %v711
      %v848 = vunpack.c.l.b16 %v712
      %v849 = vunpack.c.l.b16 %v713
      %v850 = vunpack.c.l.b16 %v714
      %v851 = vunpack.c.l.b16 %v715
      %v852 = vunpack.c.l.b16 %v716
      %v853 = vunpack.c.l.b16 %v717
      %v854 = vunpack.c.l.b16 %v718
      %v855 = vunpack.c.l.b16 %v719
      %v856 = vunpack.c.l.b16 %v720
      %v857 = vpack.c.b16 %v842, %v841
      %v858 = vpack.c.b16 %v844, %v843
      %v859 = vpack.c.b16 %v846, %v845
      %v860 = vpack.c.b16 %v848, %v847
      %v861 = vpack.c.b16 %v850, %v849
      %v862 = vpack.c.b16 %v852, %v851
      %v863 = vpack.c.b16 %v854, %v853
      %v864 = vpack.c.b16 %v856, %v855
      %873 = vmatpush.bf16.msra.mxu0 %v728
      %874 = vmatpush.bf16.msra.mxu0 %v727
      %875 = vmatpush.bf16.msra.mxu0 %v726
      %876 = vmatpush.bf16.msra.mxu0 %v725
      %877 = vmatpush.bf16.msra.mxu0 %v724
      %878 = vmatpush.bf16.msra.mxu0 %v723
      %879 = vmatpush.bf16.msra.mxu0 %v722
      %880 = vmatpush.bf16.msra.mxu0 %v721
      %881 = vmatmul.bf16.gmra.mxu0 %v857
      %v882 = vpop.f32.mrf.mxu0
      %v883 = vadd.f32 %v748, %v882
      %v884 = vpop.f32.mrf.mxu0
      %v885 = vadd.f32 %v753, %v884
      %886 = vmatmul.bf16.gmra.mxu0 %v858
      %v887 = vpop.f32.mrf.mxu0
      %v888 = vadd.f32 %v758, %v887
      %v889 = vpop.f32.mrf.mxu0
      %v890 = vadd.f32 %v763, %v889
      %891 = vmatmul.bf16.gmra.mxu0 %v859
      %v892 = vpop.f32.mrf.mxu0
      %v893 = vadd.f32 %v768, %v892
      %v894 = vpop.f32.mrf.mxu0
      %v895 = vadd.f32 %v773, %v894
      %896 = vmatmul.bf16.gmra.mxu0 %v860
      %v897 = vpop.f32.mrf.mxu0
      %v898 = vadd.f32 %v778, %v897
      %v899 = vpop.f32.mrf.mxu0
      %v900 = vadd.f32 %v783, %v899
      %901 = vmatmul.bf16.gmra.mxu0 %v861
      %v902 = vpop.f32.mrf.mxu0
      %v903 = vadd.f32 %v788, %v902
      %v904 = vpop.f32.mrf.mxu0
      %v905 = vadd.f32 %v793, %v904
      %906 = vmatmul.bf16.gmra.mxu0 %v862
      %v907 = vpop.f32.mrf.mxu0
      %v908 = vadd.f32 %v798, %v907
      %v909 = vpop.f32.mrf.mxu0
      %v910 = vadd.f32 %v803, %v909
      %911 = vmatmul.bf16.gmra.mxu0 %v863
      %v912 = vpop.f32.mrf.mxu0
      %v913 = vadd.f32 %v808, %v912
      %v914 = vpop.f32.mrf.mxu0
      %v915 = vadd.f32 %v813, %v914
      %916 = vmatmul.bf16.gmra.mxu0 %v864
      %v917 = vpop.f32.mrf.mxu0
      %v918 = vadd.f32 %v818, %v917
      %v919 = vpop.f32.mrf.mxu0
      %v920 = vadd.f32 %v823, %v919
      %921 = vdwg.mxu0
      %v922 = vmax.f32 %v883, %v893
      %v923 = vmax.f32 %v885, %v895
      %v924 = vmax.f32 %v888, %v898
      %v925 = vmax.f32 %v890, %v900
      %v926 = vmax.f32 %v922, %v903
      %v927 = vmax.f32 %v923, %v905
      %v928 = vmax.f32 %v924, %v908
      %v929 = vmax.f32 %v925, %v910
      %v930 = vmax.f32 %v926, %v913
      %v931 = vmax.f32 %v927, %v915
      %v932 = vmax.f32 %v928, %v918
      %v933 = vmax.f32 %v929, %v920
      %v934 = vmax.f32 %v930, %v931
      %v935 = vmax.f32 %v932, %v933
      %v936 = vmax.f32 %v934, %v935
      %v937 = vrot.slane %v936, 4
      %v938 = vmax.f32 %v936, %v937
      %v939 = vrot.slane %v938, 2
      %v940 = vmax.f32 %v938, %v939
      %v941 = vrot.slane %v940, 1
      %v942 = vmax.f32 %v940, %v941
      %v943 = vsub.f32 %v883, %v942
      %v944 = vsub.f32 %v885, %v942
      %v945 = vsub.f32 %v888, %v942
      %v946 = vsub.f32 %v890, %v942
      %v947 = vsub.f32 %v893, %v942
      %v948 = vsub.f32 %v895, %v942
      %v949 = vsub.f32 %v898, %v942
      %v950 = vsub.f32 %v900, %v942
      %v951 = vsub.f32 %v903, %v942
      %v952 = vsub.f32 %v905, %v942
      %v953 = vsub.f32 %v908, %v942
      %v954 = vsub.f32 %v910, %v942
      %v955 = vsub.f32 %v913, %v942
      %v956 = vsub.f32 %v915, %v942
      %v957 = vsub.f32 %v918, %v942
      %v958 = vsub.f32 %v920, %v942
      %v959 = vmul.f32 %v943, 1.442695
      %v960 = vpow.pop %v959
      %v961 = vmul.f32 %v944, 1.442695
      %v962 = vpow.pop %v961
      %v963 = vmul.f32 %v945, 1.442695
      %v964 = vpow.pop %v963
      %v965 = vmul.f32 %v946, 1.442695
      %v966 = vpow.pop %v965
      %v967 = vmul.f32 %v947, 1.442695
      %v968 = vpow.pop %v967
      %v969 = vmul.f32 %v948, 1.442695
      %v970 = vpow.pop %v969
      %v971 = vmul.f32 %v949, 1.442695
      %v972 = vpow.pop %v971
      %v973 = vmul.f32 %v950, 1.442695
      %v974 = vpow.pop %v973
      %v975 = vmul.f32 %v951, 1.442695
      %v976 = vpow.pop %v975
      %v977 = vmul.f32 %v952, 1.442695
      %v978 = vpow.pop %v977
      %v979 = vmul.f32 %v953, 1.442695
      %v980 = vpow.pop %v979
      %v981 = vmul.f32 %v954, 1.442695
      %v982 = vpow.pop %v981
      %v983 = vmul.f32 %v955, 1.442695
      %v984 = vpow.pop %v983
      %v985 = vmul.f32 %v956, 1.442695
      %v986 = vpow.pop %v985
      %v987 = vmul.f32 %v957, 1.442695
      %v988 = vpow.pop %v987
      %v989 = vmul.f32 %v958, 1.442695
      %v990 = vpow.pop %v989
      %v991 = vadd.f32 %v960, %v962
      %v992 = vadd.f32 %v991, %v964
      %v993 = vadd.f32 %v992, %v966
      %v994 = vadd.f32 %v993, %v968
      %v995 = vadd.f32 %v994, %v970
      %v996 = vadd.f32 %v995, %v972
      %v997 = vadd.f32 %v996, %v974
      %v998 = vadd.f32 %v997, %v976
      %v999 = vadd.f32 %v998, %v978
      %v1000 = vadd.f32 %v999, %v980
      %v1001 = vadd.f32 %v1000, %v982
      %v1002 = vadd.f32 %v1001, %v984
      %v1003 = vadd.f32 %v1002, %v986
      %v1004 = vadd.f32 %v1003, %v988
      %v1005 = vadd.f32 %v1004, %v990
      %v1006 = vrot.slane %v1005, 4
      %v1007 = vadd.f32 %v1005, %v1006
      %v1008 = vrot.slane %v1007, 2
      %v1009 = vadd.f32 %v1007, %v1008
      %v1010 = vrot.slane %v1009, 1
      %v1011 = vadd.f32 %v1009, %v1010
      %v1012 = vlog2.pop %v1011
      %v1013 = vmul.f32 %v1012, 0.6931472
      %v1014 = vadd.f32 %v942, %v1013
      %v1015 = vperm.slane %v284, 0
      %vm1016 = vcmp.eq.s32.totalorder %v286, %v1015
      %vm1017 = vcmp.eq.s32.totalorder %v287, %v1015
      %vm1018 = vcmp.eq.s32.totalorder %v288, %v1015
      %vm1019 = vcmp.eq.s32.totalorder %v289, %v1015
      %vm1020 = vcmp.eq.s32.totalorder %v290, %v1015
      %vm1021 = vcmp.eq.s32.totalorder %v291, %v1015
      %vm1022 = vcmp.eq.s32.totalorder %v292, %v1015
      %vm1023 = vcmp.eq.s32.totalorder %v293, %v1015
      %vm1024 = vcmp.eq.s32.totalorder %v294, %v1015
      %vm1025 = vcmp.eq.s32.totalorder %v295, %v1015
      %vm1026 = vcmp.eq.s32.totalorder %v296, %v1015
      %vm1027 = vcmp.eq.s32.totalorder %v297, %v1015
      %vm1028 = vcmp.eq.s32.totalorder %v298, %v1015
      %vm1029 = vcmp.eq.s32.totalorder %v299, %v1015
      %vm1030 = vcmp.eq.s32.totalorder %v300, %v1015
      %vm1031 = vcmp.eq.s32.totalorder %v301, %v1015
      %v1032 = vsel %vm1016, %v883, 0.0
      %v1033 = vsel %vm1017, %v885, 0.0
      %v1034 = vsel %vm1018, %v888, 0.0
      %v1035 = vsel %vm1019, %v890, 0.0
      %v1036 = vsel %vm1020, %v893, 0.0
      %v1037 = vsel %vm1021, %v895, 0.0
      %v1038 = vsel %vm1022, %v898, 0.0
      %v1039 = vsel %vm1023, %v900, 0.0
      %v1040 = vsel %vm1024, %v903, 0.0
      %v1041 = vsel %vm1025, %v905, 0.0
      %v1042 = vsel %vm1026, %v908, 0.0
      %v1043 = vsel %vm1027, %v910, 0.0
      %v1044 = vsel %vm1028, %v913, 0.0
      %v1045 = vsel %vm1029, %v915, 0.0
      %v1046 = vsel %vm1030, %v918, 0.0
      %v1047 = vsel %vm1031, %v920, 0.0
      %v1048 = vadd.f32 %v1032, %v1033
      %v1049 = vadd.f32 %v1048, %v1034
      %v1050 = vadd.f32 %v1049, %v1035
      %v1051 = vadd.f32 %v1050, %v1036
      %v1052 = vadd.f32 %v1051, %v1037
      %v1053 = vadd.f32 %v1052, %v1038
      %v1054 = vadd.f32 %v1053, %v1039
      %v1055 = vadd.f32 %v1054, %v1040
      %v1056 = vadd.f32 %v1055, %v1041
      %v1057 = vadd.f32 %v1056, %v1042
      %v1058 = vadd.f32 %v1057, %v1043
      %v1059 = vadd.f32 %v1058, %v1044
      %v1060 = vadd.f32 %v1059, %v1045
      %v1061 = vadd.f32 %v1060, %v1046
      %v1062 = vadd.f32 %v1061, %v1047
      %v1063 = vrot.slane %v1062, 4
      %v1064 = vadd.f32 %v1062, %v1063
      %v1065 = vrot.slane %v1064, 2
      %v1066 = vadd.f32 %v1064, %v1065
      %v1067 = vrot.slane %v1066, 1
      %v1068 = vadd.f32 %v1066, %v1067
      %v1069 = vsub.f32 %v1014, %v1068
      %1070 = vst [vmem:[%s282] sm:$0x1] %v1069
      %p1071 = scmp.lt.s32.totalorder %s18, 1
      %s1072 = scalar_select %p1071, %s18, 1
      %s1073 = scalar_lea.vmem %s7, %s1072
      // Predicated region
      $region49: #{model_forward.1} parent=47 // pred_check
        %p1074 = pneg %p193
      $region50: #{model_forward.1} parent=47 // pred_check_branch
        %1076 = sbr.rel (%p1074) target = $region52
      $region51: #{model_forward.1} parent=47 // pred_region
        _
      $region52: #{model_forward.1} parent=47 // pred_fallthru
        _
    $region48: #{model_forward.1} parent=5 // pred_fallthru
      _
    %p1077 = scmp.le.s32.totalorder 2, %s13
    // Predicated region
    $region53: #{model_forward.1} parent=5 // pred_check
      %p1078 = pneg %p1077
    $region54: #{model_forward.1} parent=5 // pred_check_branch
      %1080 = sbr.rel (%p1078) target = $region56
    $region55: #{model_forward.1} parent=5 // pred_region
      %s1081 = ssub.s32 %s13, 2
      // Predicated region
      $region57: #{model_forward.1} parent=55 // pred_check
        %p1082 = pneg %p199
      $region58: #{model_forward.1} parent=55 // pred_check_branch
        %1084 = sbr.rel (%p1082) target = $region60
      $region59: #{model_forward.1} parent=55 // pred_region
        %p1085 = scmp.lt.s32.totalorder %s19, 1
        %s1086 = scalar_select %p1085, %s19, 1
        %s1087 = scalar_lea.vmem %s7, %s1086
      $region60: #{model_forward.1} parent=55 // pred_fallthru
        _
    $region56: #{model_forward.1} parent=5 // pred_fallthru
      _
  $region6: #{model_forward.1} parent=0 // loop_footer
    %s17 = sadd.s32 1, %s13
  $region7: #{model_forward.1} parent=0 // loop_footer_branch
    %12 = sbr.rel target = $region3
  $region8: #{model_forward.1} parent=0 // loop_exit
    _

</llo_original>
